<compile_context>
chip_gen: v7x
topology: tpu7x:2x2x1
jax: 0.10.0
libtpu: 0.0.40
codegen_flags: <defaults>
</compile_context>

<pallas_src>
import math
from typing import NamedTuple, Optional

import jax
import jax.numpy as jnp
from jax.experimental import pallas as pl
from jax.experimental.pallas import tpu as pltpu


def _round_up(x, m):
    return (x + m - 1) // m * m


class ScaledLinearParams(NamedTuple):
    """Forward-ready parameters. Built once at init, reused every call."""
    w_t: jax.Array                 # (Kp, Np) = weight.T, padded, original dtype
    b: Optional[jax.Array]         # (1, Np) float32 bias, or None
    dim_in: int                    # K (fan_in)
    dim_out: int                   # N
    k_pad: int                     # Kp
    n_pad: int                     # Np
    tile_n: int
    tile_k: int
    scale: float                   # sqrt(2 / fan_in)


def prepare_scaled_linear(weight, bias=None, *, tile_n=512, tile_k=1024,
                          min_n_blocks=2):
    """One-time weight prep: transpose to (K, N), pad to the tile grid,
    pre-cast bias to f32.  Call at parameter-init time, not per forward."""
    N, K = weight.shape
    scale = math.sqrt(2.0 / K)     # fan_in = weight.size(1) for nn.Linear

    tk = min(tile_k, _round_up(K, 128))
    n_aligned = _round_up(N, 128)
    tn = min(tile_n, n_aligned)
    # Keep >=2 N blocks (128-aligned) so both v7x TensorCores get a parallel
    # block even when the M grid is a single block (decode-style shapes).
    if min_n_blocks > 1 and n_aligned >= min_n_blocks * 128:
        tn = min(tn, _round_up(pl.cdiv(n_aligned, min_n_blocks), 128))

    Kp = _round_up(K, tk)
    Np = _round_up(N, tn)

    w_t = weight.T                                   # (K, N), once
    if (Kp, Np) != (K, N):
        w_t = jnp.pad(w_t, ((0, Kp - K), (0, Np - N)))

    b = None
    if bias is not None:
        b = bias.astype(jnp.float32)                 # epilogue add needs no cast
        if Np != N:
            b = jnp.pad(b, (0, Np - N))
        b = b.reshape(1, Np)

    return ScaledLinearParams(w_t, b, K, N, Kp, Np, tn, tk, scale)


def _make_kernel(scale, has_bias, single_k):
    """Build the kernel body specialized on (bias present, single k-step)."""
    def kernel(*refs):
        if has_bias:
            x_ref, w_ref, b_ref = refs[0], refs[1], refs[2]
            rest = refs[3:]
        else:
            x_ref, w_ref = refs[0], refs[1]
            b_ref = None
            rest = refs[2:]

        if single_k:
            # Whole K fits one step: no scratch, write scaled+biased dot directly.
            (o_ref,) = rest
            y = jnp.dot(x_ref[...], w_ref[...],
                        preferred_element_type=jnp.float32) * scale
            if has_bias:
                y = y + b_ref[...]
            o_ref[...] = y.astype(o_ref.dtype)
        else:
            o_ref, acc_ref = rest
            k = pl.program_id(2)

            @pl.when(k == 0)
            def _():
                acc_ref[...] = jnp.zeros_like(acc_ref)

            acc_ref[...] += jnp.dot(x_ref[...], w_ref[...],
                                    preferred_element_type=jnp.float32)

            # Epilogue once, on the small f32 accumulator.
            @pl.when(k == pl.num_programs(2) - 1)
            def _():
                y = acc_ref[...] * scale
                if has_bias:
                    y = y + b_ref[...]
                o_ref[...] = y.astype(o_ref.dtype)

    return kernel


def scaled_linear(x, params: ScaledLinearParams, *, tile_m=256,
                  weight_buffering=2):
    """x: (M, dim_in).  params: from prepare_scaled_linear().  Returns (M, dim_out)."""
    M, K = x.shape
    assert K == params.dim_in, "weight dim_in mismatch"
    N, Kp, Np = params.dim_out, params.k_pad, params.n_pad
    tn, tk = params.tile_n, params.tile_k
    has_bias = params.b is not None

    # dtype-aware sublane packing for the M clamp: f32 -> 8, bf16 -> 16, int8/fp8 -> 32.
    pack = 8 * max(1, 4 // jnp.dtype(x.dtype).itemsize)
    tm = min(tile_m, _round_up(M, pack))
    Mp = _round_up(M, tm)

    x_p = x if (Mp == M and Kp == K) else jnp.pad(x, ((0, Mp - M), (0, Kp - K)))

    single_k = (Kp == tk)

    # Optional deeper buffering on the weight stream for weight-HBM-bound
    # (small-M) shapes; default 2 keeps the standard double-buffer.
    w_kwargs = {}
    if weight_buffering != 2:
        w_kwargs["pipeline_mode"] = pl.Buffered(weight_buffering)

    if single_k:
        grid = (Mp // tm, Np // tn)
        x_spec = pl.BlockSpec((tm, tk), lambda i, j: (i, 0))
        w_spec = pl.BlockSpec((tk, tn), lambda i, j: (0, j), **w_kwargs)
        b_spec = pl.BlockSpec((1, tn), lambda i, j: (0, j))
        o_spec = pl.BlockSpec((tm, tn), lambda i, j: (i, j))
        scratch = []
        semantics = ("parallel", "parallel")
    else:
        grid = (Mp // tm, Np // tn, Kp // tk)
        x_spec = pl.BlockSpec((tm, tk), lambda i, j, k: (i, k))
        w_spec = pl.BlockSpec((tk, tn), lambda i, j, k: (k, j), **w_kwargs)
        b_spec = pl.BlockSpec((1, tn), lambda i, j, k: (0, j))
        o_spec = pl.BlockSpec((tm, tn), lambda i, j, k: (i, j))
        scratch = [pltpu.VMEM((tm, tn), jnp.float32)]
        semantics = ("parallel", "parallel", "arbitrary")

    in_specs = [x_spec, w_spec] + ([b_spec] if has_bias else [])
    inputs = (x_p, params.w_t) + ((params.b,) if has_bias else ())

    # VMEM budget: double-buffered tiles + f32 accumulator.  Raise past v5e's
    # 16 MiB default but stay well under v7x's 64 MiB physical VMEM.
    x_item = jnp.dtype(x.dtype).itemsize
    w_item = jnp.dtype(params.w_t.dtype).itemsize
    o_item = x_item
    footprint = 2 * (tm * tk * x_item + tk * tn * w_item + tm * tn * o_item)
    footprint += tm * tn * 4
    if has_bias:
        footprint += 2 * tn * 4
    vmem_limit = int(min(48 << 20, max(32 << 20, footprint + (8 << 20))))

    cost = pl.CostEstimate(
        flops=2 * M * N * K,
        transcendentals=0,
        bytes_accessed=(M * K * x_item + K * N * w_item + M * N * o_item
                        + (N * 4 if has_bias else 0)),
    )

    kernel = _make_kernel(params.scale, has_bias, single_k)

    out_p = pl.pallas_call(
        kernel,
        out_shape=jax.ShapeDtypeStruct((Mp, Np), x.dtype),
        grid_spec=pltpu.PrefetchScalarGridSpec(
            num_scalar_prefetch=0,
            grid=grid,
            in_specs=in_specs,
            out_specs=o_spec,
            scratch_shapes=scratch,
        ),
        compiler_params=pltpu.CompilerParams(
            dimension_semantics=semantics,
            vmem_limit_bytes=vmem_limit,
        ),
        cost_estimate=cost,
    )(*inputs)

    if (Mp, Np) == (M, N):
        return out_p
    return out_p[:M, :N]


if __name__ == "__main__":
    key = jax.random.PRNGKey(0)
    kx, kw, kx2, kw2 = jax.random.split(key, 4)

    # ---- Config 1: module-init shapes, f32, with (zero) bias ----------------
    # ScaledLinear(dim_in=32, dim_out=16): weight ~ N(0,1), bias = 0.
    batch, dim_in, dim_out = 8, 32, 16
    weight = jax.random.normal(kw, (dim_out, dim_in), dtype=jnp.float32)
    bias = jnp.zeros((dim_out,), dtype=jnp.float32)
    x = jax.random.normal(kx, (batch, dim_in), dtype=jnp.float32)

    params = prepare_scaled_linear(weight, bias)        # one-time weight prep
    out = jax.block_until_ready(scaled_linear(x, params))

    ref = x @ (weight * math.sqrt(2.0 / dim_in)).T + bias
    assert out.shape == (batch, dim_out)
    assert jnp.allclose(out, ref, atol=1e-5, rtol=1e-5), (
        float(jnp.max(jnp.abs(out - ref))))

    # ---- Config 2: bf16 operands, multi-k accumulator path, no bias ---------
    batch2, dim_in2, dim_out2 = 16, 256, 256
    w2 = jax.random.normal(kw2, (dim_out2, dim_in2), jnp.float32).astype(jnp.bfloat16)
    x2 = jax.random.normal(kx2, (batch2, dim_in2), jnp.float32).astype(jnp.bfloat16)

    params2 = prepare_scaled_linear(w2, None, tile_n=128, tile_k=128)
    out2 = jax.block_until_ready(scaled_linear(x2, params2, tile_m=128))

    ref2 = x2.astype(jnp.float32) @ (
        w2.astype(jnp.float32) * math.sqrt(2.0 / dim_in2)).T
    assert out2.shape == (batch2, dim_out2)
    assert jnp.allclose(out2.astype(jnp.float32), ref2, atol=2e-1, rtol=2e-2), (
        float(jnp.max(jnp.abs(out2.astype(jnp.float32) - ref2))))

    print("KERNEL_OK")
</pallas_src>

<mosaic_0001>
module attributes {stable_mosaic.version = 11 : i64} {
  func.func @kernel(%arg0: i32, %arg1: i32, %arg2: memref<8x128xf32, #tpu.memory_space<vmem>>, %arg3: memref<128x128xf32, #tpu.memory_space<vmem>>, %arg4: memref<1x128xf32, #tpu.memory_space<vmem>>, %arg5: memref<8x128xf32, #tpu.memory_space<vmem>>) attributes {dimension_semantics = [#tpu.dimension_semantics<parallel>, #tpu.dimension_semantics<parallel>], iteration_bounds = array<i64: 1, 1>, scalar_prefetch = 0 : i64, scratch_operands = 0 : i64, tpu.core_type = #tpu.core_type<tc>, window_params = [{transform_indices = @transform_0, window_bounds = array<i64: 8, 128>}, {transform_indices = @transform_1, window_bounds = array<i64: 128, 128>}, {transform_indices = @transform_2, window_bounds = array<i64: 1, 128>}, {transform_indices = @transform_3, window_bounds = array<i64: 8, 128>}]} {
    %c0 = arith.constant 0 : index
    %c0_0 = arith.constant 0 : index
    %0 = vector.load %arg2[%c0, %c0_0] : memref<8x128xf32, #tpu.memory_space<vmem>>, vector<8x128xf32>
    %c0_1 = arith.constant 0 : index
    %c0_2 = arith.constant 0 : index
    %1 = vector.load %arg3[%c0_1, %c0_2] : memref<128x128xf32, #tpu.memory_space<vmem>>, vector<128x128xf32>
    %cst = arith.constant dense<0.000000e+00> : vector<8x128xf32>
    %2 = tpu.matmul %0, %1, %cst {dimension_numbers = #tpu.dot_dimension_numbers<[1], [0], [0], [1], [0, 0, 1, 1], [], []>} : vector<8x128xf32>, vector<128x128xf32>, vector<8x128xf32> -> vector<8x128xf32>
    %cst_3 = arith.constant 2.500000e-01 : f32
    %3 = vector.broadcast %cst_3 : f32 to vector<8x128xf32>
    %4 = arith.mulf %2, %3 : vector<8x128xf32>
    %c0_4 = arith.constant 0 : index
    %c0_5 = arith.constant 0 : index
    %5 = vector.load %arg4[%c0_4, %c0_5] : memref<1x128xf32, #tpu.memory_space<vmem>>, vector<1x128xf32>
    %6 = vector.broadcast %5 : vector<1x128xf32> to vector<8x128xf32>
    %7 = arith.addf %4, %6 : vector<8x128xf32>
    %c0_6 = arith.constant 0 : index
    %c0_7 = arith.constant 0 : index
    %8 = vector.load %arg5[%c0_6, %c0_7] : memref<8x128xf32, #tpu.memory_space<vmem>>, vector<8x128xf32>
    tpu.vector_store %arg5[%c0_6, %c0_7], %7 {strides = array<i32>} : memref<8x128xf32, #tpu.memory_space<vmem>>, vector<8x128xf32>,
    return
  }
  func.func @transform_0(%arg0: i32, %arg1: i32) -> (i32, i32) {
    %c0_i32 = arith.constant 0 : i32
    %c0_i32_0 = arith.constant 0 : i32
    return %arg0, %c0_i32 : i32, i32
  }
  func.func @transform_1(%arg0: i32, %arg1: i32) -> (i32, i32) {
    %c0_i32 = arith.constant 0 : i32
    %c0_i32_0 = arith.constant 0 : i32
    return %c0_i32, %arg1 : i32, i32
  }
  func.func @transform_2(%arg0: i32, %arg1: i32) -> (i32, i32) {
    %c0_i32 = arith.constant 0 : i32
    %c0_i32_0 = arith.constant 0 : i32
    return %c0_i32, %arg1 : i32, i32
  }
  func.func @transform_3(%arg0: i32, %arg1: i32) -> (i32, i32) {
    %c0_i32 = arith.constant 0 : i32
    return %arg0, %arg1 : i32, i32
  }
}

</mosaic_0001>

<llo_original>
// kernel: tpu_custom_call.1
$region0: #{tpu_custom_call.1}
  #allocation0 [shape = 'u32[]', space=smem, size = 0x4, offset = 0x4, fixed_abs, tag = 'smem constant byte address 0x4 - core index']
  #allocation1 [shape = 'u32[144,128]{1,0:T(1,128)}', space=vmem, size = 0x12000, scoped, tag = 'internal scratch']
  %s0 = inlined_call_operand.hbm [shape: f32[8,128], index: 0, kind: input, shape index: {}]
  %s1 = inlined_call_operand.hbm [shape: f32[128,128], index: 1, kind: input, shape index: {}]
  %s2 = inlined_call_operand.vmem [shape: f32[1,128], index: 2, kind: input, shape index: {}]
  %s3 = inlined_call_operand.hbm [shape: f32[8,128], index: 3, kind: output, shape index: {}]
  %s4 = sld [smem:[#allocation0]]
  $region30: #{tpu_custom_call.1} parent=0
    _
  %s6 = ssub.s32 1, %s4
  %s7 = scalar_select 0, %s6, %s4
  $region1: #{tpu_custom_call.1} parent=0
    #allocation2 [shape = 'u8[4096]{0}', space=vmem, size = 0x1000, scoped, tag = 'input window, operand 0, single buffered']
    #allocation3 [shape = 's32[1]{0}', space=sflag, size = 0x4, scoped, tag = 'scoped memory for tpu_custom_call.1']
    #allocation4 [shape = 's32[1]{0}', space=sflag, size = 0x4, scoped, tag = 'scoped memory for tpu_custom_call.1']
    #allocation5 [shape = 'u8[65536]{0}', space=vmem, size = 0x10000, scoped, tag = 'input window, operand 1, single buffered']
    #allocation6 [shape = 's32[1]{0}', space=sflag, size = 0x4, scoped, tag = 'scoped memory for tpu_custom_call.1']
    #allocation7 [shape = 'u8[4096]{0}', space=vmem, size = 0x1000, scoped, tag = 'output window, operand 0, single buffered']
    %8 = vsyncpa [#allocation3], 0
    %9 = vsyncpa [#allocation6], 0
    %10 = vsyncpa [#allocation4], 0
    // Predicated region
    $region2: #{tpu_custom_call.1} parent=1 // pred_check
      _
    $region3: #{tpu_custom_call.1} parent=1 // pred_check_branch
      %12 = sbr.rel (0) target = $region5
    $region4: #{tpu_custom_call.1} parent=1 // pred_region
      %s14 = ssub.s32 128, 128
      %15 = vsyncadd [#allocation3], %s14
      %s17 = sshll.u32 [#allocation2], 4
      %s18 = int_to_ptr.vmem [resolvable:$true] %s17
      %20 = dma.hbm_to_vmem [thread:$0]  %s0, 128, %s18, [#allocation3]
    $region5: #{tpu_custom_call.1} parent=1 // pred_fallthru
      _
    // Predicated region
    $region6: #{tpu_custom_call.1} parent=1 // pred_check
      _
    $region7: #{tpu_custom_call.1} parent=1 // pred_check_branch
      %22 = sbr.rel (0) target = $region9
    $region8: #{tpu_custom_call.1} parent=1 // pred_region
      %s24 = ssub.s32 2048, 2048
      %25 = vsyncadd [#allocation6], %s24
      %s26 = sshll.u32 [#allocation5], 4
      %s27 = int_to_ptr.vmem [resolvable:$true] %s26
      %32 = dma.hbm_to_vmem [thread:$0]  %s1, 2048, %s27, [#allocation6], 128, 128, 8
    $region9: #{tpu_custom_call.1} parent=1 // pred_fallthru
      _
    // Predicated region
    $region10: #{tpu_custom_call.1} parent=1 // pred_check
      _
    $region11: #{tpu_custom_call.1} parent=1 // pred_check_branch
      %34 = sbr.rel (0) target = $region13
    $region12: #{tpu_custom_call.1} parent=1 // pred_region
      _
    $region13: #{tpu_custom_call.1} parent=1 // pred_fallthru
      _
    // Predicated region
    $region14: #{tpu_custom_call.1} parent=1 // pred_check
      _
    $region15: #{tpu_custom_call.1} parent=1 // pred_check_branch
      %36 = sbr.rel (0) target = $region17
    $region16: #{tpu_custom_call.1} parent=1 // pred_region
      %37 = dma.done [#allocation3], 128
    $region17: #{tpu_custom_call.1} parent=1 // pred_fallthru
      _
    // Predicated region
    $region18: #{tpu_custom_call.1} parent=1 // pred_check
      _
    $region19: #{tpu_custom_call.1} parent=1 // pred_check_branch
      %39 = sbr.rel (0) target = $region21
    $region20: #{tpu_custom_call.1} parent=1 // pred_region
      %40 = dma.done [#allocation6], 2048
    $region21: #{tpu_custom_call.1} parent=1 // pred_fallthru
      _
    %v41 = vld [vmem:[#allocation2] sm:$0xff]
    %v42 = vld [vmem:[#allocation5] sm:$0xff]
    %v43 = vld [vmem:[#allocation5 + $0x8] sm:$0xff]
    %v44 = vld [vmem:[#allocation5 + $0x10] sm:$0xff]
    %v45 = vld [vmem:[#allocation5 + $0x18] sm:$0xff]
    %v46 = vld [vmem:[#allocation5 + $0x20] sm:$0xff]
    %v47 = vld [vmem:[#allocation5 + $0x28] sm:$0xff]
    %v48 = vld [vmem:[#allocation5 + $0x30] sm:$0xff]
    %v49 = vld [vmem:[#allocation5 + $0x38] sm:$0xff]
    %v50 = vld [vmem:[#allocation5 + $0x40] sm:$0xff]
    %v51 = vld [vmem:[#allocation5 + $0x48] sm:$0xff]
    %v52 = vld [vmem:[#allocation5 + $0x50] sm:$0xff]
    %v53 = vld [vmem:[#allocation5 + $0x58] sm:$0xff]
    %v54 = vld [vmem:[#allocation5 + $0x60] sm:$0xff]
    %v55 = vld [vmem:[#allocation5 + $0x68] sm:$0xff]
    %v56 = vld [vmem:[#allocation5 + $0x70] sm:$0xff]
    %v57 = vld [vmem:[#allocation5 + $0x78] sm:$0xff]
    %58 = vmatprep.subr.mxu0 0.0
    %59 = vmatpush1.msra.mxu0 %v42
    %60 = vmatprep.subr.mxu0 0.0
    %61 = vmatpush1.msra.mxu0 %v43
    %62 = vmatprep.subr.mxu0 0.0
    %63 = vmatpush1.msra.mxu0 %v44
    %64 = vmatprep.subr.mxu0 0.0
    %65 = vmatpush1.msra.mxu0 %v45
    %66 = vmatprep.subr.mxu0 0.0
    %67 = vmatpush1.msra.mxu0 %v46
    %68 = vmatprep.subr.mxu0 0.0
    %69 = vmatpush1.msra.mxu0 %v47
    %70 = vmatprep.subr.mxu0 0.0
    %71 = vmatpush1.msra.mxu0 %v48
    %72 = vmatprep.subr.mxu0 0.0
    %73 = vmatpush1.msra.mxu0 %v49
    %74 = vmatprep.subr.mxu0 0.0
    %75 = vmatpush1.msra.mxu0 %v50
    %76 = vmatprep.subr.mxu0 0.0
    %77 = vmatpush1.msra.mxu0 %v51
    %78 = vmatprep.subr.mxu0 0.0
    %79 = vmatpush1.msra.mxu0 %v52
    %80 = vmatprep.subr.mxu0 0.0
    %81 = vmatpush1.msra.mxu0 %v53
    %82 = vmatprep.subr.mxu0 0.0
    %83 = vmatpush1.msra.mxu0 %v54
    %84 = vmatprep.subr.mxu0 0.0
    %85 = vmatpush1.msra.mxu0 %v55
    %86 = vmatprep.subr.mxu0 0.0
    %87 = vmatpush1.msra.mxu0 %v56
    %88 = vmatprep.subr.mxu0 0.0
    %89 = vmatpush1.msra.mxu0 %v57
    %90 = vmatprep.subr.mxu0 0.0
    %91 = vmatpush1.msra.mxu0 0.0
    %92 = vmatprep.subr.mxu0 0.0
    %93 = vmatpush1.msra.mxu0 0.0
    %94 = vmatprep.subr.mxu0 0.0
    %95 = vmatpush1.msra.mxu0 0.0
    %96 = vmatprep.subr.mxu0 0.0
    %97 = vmatpush1.msra.mxu0 0.0
    %98 = vmatprep.subr.mxu0 0.0
    %99 = vmatpush1.msra.mxu0 0.0
    %100 = vmatprep.subr.mxu0 0.0
    %101 = vmatpush1.msra.mxu0 0.0
    %102 = vmatprep.subr.mxu0 0.0
    %103 = vmatpush1.msra.mxu0 0.0
    %104 = vmatprep.subr.mxu0 0.0
    %105 = vmatpush1.msra.mxu0 0.0
    %106 = vmatprep.subr.mxu0 0.0
    %107 = vmatpush1.msra.mxu0 0.0
    %108 = vmatprep.subr.mxu0 0.0
    %109 = vmatpush1.msra.mxu0 0.0
    %110 = vmatprep.subr.mxu0 0.0
    %111 = vmatpush1.msra.mxu0 0.0
    %112 = vmatprep.subr.mxu0 0.0
    %113 = vmatpush1.msra.mxu0 0.0
    %114 = vmatprep.subr.mxu0 0.0
    %115 = vmatpush1.msra.mxu0 0.0
    %116 = vmatprep.subr.mxu0 0.0
    %117 = vmatpush1.msra.mxu0 0.0
    %118 = vmatprep.subr.mxu0 0.0
    %119 = vmatpush1.msra.mxu0 0.0
    %120 = vmatprep.subr.mxu0 0.0
    %121 = vmatpush1.msra.mxu0 0.0
    %122 = vmatprep.mubr.f32.mxu0 0.0
    %123 = vmatmul.mubr.f32.gmra.mrb[0].mxu0 %v41
    %v124 = vpop.f32.mrb[0].mxu0
    %v125 = vadd.f32 0.0, %v124
    %v126 = vpop.f32.mrb[0].mxu0
    %127 = vdwg.mxu0
    %v128 = vmul.f32 %v125, 0.25
    %v129 = vld [vmem:[%s2] sm:$0x1]
    %v131 = vlaneseq
    %v132 = vshrl.u32 %v131, 7
    %v133 = vsub.s32 0, %v132
    %v134 = vrot.slane %v129, %v133
    %v136 = vadd.f32 %v128, %v134
    %137 = vst [vmem:[#allocation7] sm:$0xff] %v136
    // Predicated region
    $region22: #{tpu_custom_call.1} parent=1 // pred_check
      _
    $region23: #{tpu_custom_call.1} parent=1 // pred_check_branch
      %139 = sbr.rel (0) target = $region25
    $region24: #{tpu_custom_call.1} parent=1 // pred_region
      %s141 = ssub.s32 128, 128
      %142 = vsyncadd [#allocation4], %s141
      %s144 = sshll.u32 [#allocation7], 4
      %s145 = int_to_ptr.vmem [resolvable:$true] %s144
      %147 = dma.vmem_to_hbm [thread:$0]  %s145, 128, %s3, [#allocation4]
    $region25: #{tpu_custom_call.1} parent=1 // pred_fallthru
      _
    // Predicated region
    $region26: #{tpu_custom_call.1} parent=1 // pred_check
      _
    $region27: #{tpu_custom_call.1} parent=1 // pred_check_branch
      %149 = sbr.rel (0) target = $region29
    $region28: #{tpu_custom_call.1} parent=1 // pred_region
      %150 = dma.done [#allocation4], 128
    $region29: #{tpu_custom_call.1} parent=1 // pred_fallthru
      _
    %151 = vsyncpa [#allocation3], 1
    %152 = vsyncpa [#allocation6], 1
    %153 = vsyncpa [#allocation4], 1

</llo_original>
